<compile_context>
chip_gen: v7x
topology: tpu7x:2x2x1
jax: 0.10.0
libtpu: 0.0.40
codegen_flags: <defaults>
</compile_context>

<pallas_src>
import jax
import jax.numpy as jnp
from jax.experimental import pallas as pl
from jax.experimental.pallas import tpu as pltpu


def _pooler_kernel(x_ref, wt_ref, b_ref, o_ref):
    # x_ref : [tb, H]   first-token activations for this batch block
    # wt_ref: [H, tn]   pre-transposed weight W^T (in, out) -> plain x @ Wt,
    #                   consumed natively by the MXU (no in-kernel transpose)
    # b_ref : [1, tn]   bias slice
    # o_ref : [tb, tn]  pooled output block
    y = jnp.dot(x_ref[...], wt_ref[...], preferred_element_type=jnp.float32)
    y = y + b_ref[...].astype(jnp.float32)            # f32 epilogue (v5e-safe)
    o_ref[...] = jnp.tanh(y).astype(o_ref.dtype)      # tanh -> EUP, free under MXU


def _vmem_capacity_bytes():
    """Physical VMEM per TensorCore (128 MiB v5e/v6e, 64 MiB v7x)."""
    try:
        info = pltpu.get_tpu_info()
        cap = getattr(info, "vmem_capacity_bytes", None)
        if cap:
            return int(cap)
    except Exception:
        pass
    return 64 << 20  # conservative fallback (v7x per-TC)


def _min_batch_tile(itemsize):
    # Sub-32-bit dtypes pack along sublanes: native tiles are (8,128) for f32,
    # (16,128) for bf16, (32,128) for int8/fp8.
    return {4: 8, 2: 16, 1: 32}.get(itemsize, 8)


def _pick_n_block(H, w_itemsize, weight_budget):
    """Output-column tile for the weight; H (no N-tiling) when it fits."""
    if H * H * w_itemsize <= weight_budget:
        return H
    for tn in (2048, 1024, 512, 256, 128):            # lane-dense, MXU-wide
        if H % tn == 0 and H * tn * w_itemsize <= weight_budget:
            return tn
    return 128 if H % 128 == 0 else H


def _pick_batch_block(B, min_tb, max_tb):
    """Largest aligned divisor of B within the VMEM budget, preferring >=2
    grid steps so the 'parallel' batch axis can shard across v7x's 2 TCs."""
    max_tb = max(min_tb, (max_tb // min_tb) * min_tb)
    cands = [d for d in range(min_tb, min(B, max_tb) + 1, min_tb) if B % d == 0]
    if not cands:
        return B                                       # tiny batch: one full block
    multi = [d for d in cands if B // d >= 2]
    return max(multi) if multi else max(cands)


def pooler_forward(hidden_states, weight, bias, *, block_b=None, weight_bf16=None):
    """BERT Pooler forward: tanh(hidden_states[:, 0] @ W^T + b).

    hidden_states: [B, S, H]; weight: [H, H] (out_features, in_features); bias: [H].
    weight_bf16: cast weight (+activations) to bf16 to halve HBM/VMEM traffic
                 (auto-enabled when hidden_states is bf16).
    """
    B, S, H = hidden_states.shape
    out_dtype = hidden_states.dtype

    # One-time weight prep (outside the grid): pre-transpose so the kernel does
    # x @ Wt with a standard contraction -> no per-step XLU transpose possible.
    wt = weight.T
    if weight_bf16 is None:
        weight_bf16 = hidden_states.dtype == jnp.bfloat16

    # First-token slice.
    if H % 128 == 0:
        # Fused into the input DMA: view [B,S,H] as [B,S*H] (free reshape); the
        # x BlockSpec pulls only columns [0, H) of each batch-row block.
        x_in = hidden_states.reshape(B, S * H)
    else:
        # Non-lane-aligned H (tiny shapes): slice in JAX so blocks stay legal.
        x_in = hidden_states[:, 0]

    if weight_bf16:
        x_in = x_in.astype(jnp.bfloat16)
        wt = wt.astype(jnp.bfloat16)
    if wt.dtype != x_in.dtype:
        wt = wt.astype(x_in.dtype)                     # keep the matmul single-dtype

    in_isz = jnp.dtype(x_in.dtype).itemsize
    w_isz = jnp.dtype(wt.dtype).itemsize
    out_isz = jnp.dtype(out_dtype).itemsize

    # Generation-aware VMEM budget.
    vmem_cap = _vmem_capacity_bytes()
    vmem_budget = int(0.8 * vmem_cap)

    # Weight gets ~1/3 of the budget before we start N-tiling it.
    tn = _pick_n_block(H, w_isz, vmem_budget // 3)
    n_tiled = tn < H
    nn = H // tn

    # Batch tile: fill remaining VMEM with (double-buffered) x / out tiles.
    min_tb = _min_batch_tile(in_isz)
    w_buf_bytes = H * tn * w_isz * (2 if n_tiled else 1)   # Buffered(1) when resident
    row_bytes = 2 * H * in_isz + 2 * tn * out_isz
    max_tb = max(min_tb, (vmem_budget - w_buf_bytes) // max(row_bytes, 1))
    max_tb = min(512, max_tb)                          # amortize ~0.35us/grid-step

    tb = block_b if block_b is not None else _pick_batch_block(B, min_tb, max_tb)
    if B % tb != 0 or (tb % min_tb != 0 and tb != B):
        tb = _pick_batch_block(B, min_tb, max_tb)
    nb = B // tb

    bias2d = bias.reshape(1, H)

    cost = pl.CostEstimate(
        flops=2 * B * H * H,
        transcendentals=B * H,
        bytes_accessed=(B * H * in_isz
                        + H * H * w_isz
                        + H * jnp.dtype(bias.dtype).itemsize
                        + B * H * out_isz),
    )

    def build(single_buffer_resident):
        resident_kwargs = {}
        if single_buffer_resident:
            # Constant index_map operands: one buffer is enough (halves the
            # resident weight's VMEM footprint).
            resident_kwargs = dict(pipeline_mode=pl.Buffered(buffer_count=1))

        if nn == 1:
            grid = (nb,)
            in_specs = [
                pl.BlockSpec((tb, H), lambda i: (i, 0)),
                pl.BlockSpec((H, H), lambda i: (0, 0), **resident_kwargs),
                pl.BlockSpec((1, H), lambda i: (0, 0), **resident_kwargs),
            ]
            out_specs = pl.BlockSpec((tb, H), lambda i: (i, 0))
            dims = ("parallel",)
        else:
            # Large-H path: N-tile the weight across a second (parallel) grid
            # axis; the x tile's block index is constant across j so it stays
            # VMEM-resident for the whole column sweep.
            grid = (nb, nn)
            in_specs = [
                pl.BlockSpec((tb, H), lambda i, j: (i, 0)),
                pl.BlockSpec((H, tn), lambda i, j: (0, j)),
                pl.BlockSpec((1, tn), lambda i, j: (0, j)),
            ]
            out_specs = pl.BlockSpec((tb, tn), lambda i, j: (i, j))
            dims = ("parallel", "parallel")

        return pl.pallas_call(
            _pooler_kernel,
            out_shape=jax.ShapeDtypeStruct((B, H), out_dtype),
            grid=grid,
            in_specs=in_specs,
            out_specs=out_specs,
            compiler_params=pltpu.CompilerParams(
                dimension_semantics=dims,
                vmem_limit_bytes=vmem_budget,
            ),
            cost_estimate=cost,
        )

    args = (x_in, wt, bias2d)
    if nn == 1:
        try:
            return build(True)(*args)
        except Exception:
            # pipeline_mode=pl.Buffered(1) not supported by this Pallas build:
            # fall back to default double-buffering (correct, slightly more VMEM).
            pass
    return build(False)(*args)


if __name__ == "__main__":
    key = jax.random.PRNGKey(0)

    def ref_pooler(hs, w, b):
        return jnp.tanh(hs[:, 0].astype(jnp.float32) @ w.T.astype(jnp.float32)
                        + b.astype(jnp.float32))

    # Case 1: module-scale shapes (batch=2, seq=8, hidden=32).
    # H not lane-aligned -> exercises the sliced-input fallback path.
    B, S, H = 2, 8, 32
    k1, k2, k3, key = jax.random.split(key, 4)
    hs = jax.random.normal(k1, (B, S, H), dtype=jnp.float32)
    w = jax.random.normal(k2, (H, H), dtype=jnp.float32) * 0.05
    b = jax.random.normal(k3, (H,), dtype=jnp.float32) * 0.05
    out = jax.block_until_ready(pooler_forward(hs, w, b))
    assert out.shape == (B, H)
    assert jnp.allclose(out, ref_pooler(hs, w, b), atol=1e-5, rtol=1e-5)

    # Case 2: lane-aligned hidden size + multi-step batch grid.
    # Exercises the fused first-token DMA, the single-buffered resident weight
    # and the >=2-step parallel batch grid (auto tb=8 -> grid=(2,)).
    B, S, H = 16, 8, 128
    k1, k2, k3, key = jax.random.split(key, 4)
    hs = jax.random.normal(k1, (B, S, H), dtype=jnp.float32)
    w = jax.random.normal(k2, (H, H), dtype=jnp.float32) * 0.05
    b = jax.random.normal(k3, (H,), dtype=jnp.float32) * 0.05
    out = jax.block_until_ready(pooler_forward(hs, w, b))
    assert out.shape == (B, H)
    # Looser tolerance: K=128 matmul under TPU default (bf16-pass) precision.
    assert jnp.allclose(out, ref_pooler(hs, w, b), atol=5e-3, rtol=1e-2)

    # Case 3: bf16 activations -> dtype-aware batch tile (>=16) and bf16 weight.
    B, S, H = 32, 4, 256
    k1, k2, k3, key = jax.random.split(key, 4)
    hs = jax.random.normal(k1, (B, S, H), dtype=jnp.float32).astype(jnp.bfloat16)
    w = jax.random.normal(k2, (H, H), dtype=jnp.float32) * 0.05
    b = jax.random.normal(k3, (H,), dtype=jnp.float32) * 0.05
    out = jax.block_until_ready(pooler_forward(hs, w, b))
    assert out.shape == (B, H) and out.dtype == jnp.bfloat16
    assert jnp.allclose(out.astype(jnp.float32), ref_pooler(hs, w, b),
                        atol=2e-2, rtol=2e-2)

    print("KERNEL_OK")
</pallas_src>

<mosaic_0001>
module attributes {stable_mosaic.version = 11 : i64} {
  func.func @_pooler_kernel(%arg0: i32, %arg1: memref<2x32xf32, #tpu.memory_space<vmem>>, %arg2: memref<32x32xf32, #tpu.memory_space<vmem>>, %arg3: memref<1x32xf32, #tpu.memory_space<vmem>>, %arg4: memref<2x32xf32, #tpu.memory_space<vmem>>) attributes {dimension_semantics = [#tpu.dimension_semantics<parallel>], iteration_bounds = array<i64: 1>, scalar_prefetch = 0 : i64, scratch_operands = 0 : i64, tpu.core_type = #tpu.core_type<tc>, window_params = [{transform_indices = @transform_0, window_bounds = array<i64: 2, 32>}, {pipeline_mode = #tpu.pipeline_mode<synchronous>, transform_indices = @transform_1, window_bounds = array<i64: 32, 32>}, {pipeline_mode = #tpu.pipeline_mode<synchronous>, transform_indices = @transform_2, window_bounds = array<i64: 1, 32>}, {transform_indices = @transform_3, window_bounds = array<i64: 2, 32>}]} {
    %c0 = arith.constant 0 : index
    %c0_0 = arith.constant 0 : index
    %0 = vector.load %arg1[%c0, %c0_0] : memref<2x32xf32, #tpu.memory_space<vmem>>, vector<2x32xf32>
    %c0_1 = arith.constant 0 : index
    %c0_2 = arith.constant 0 : index
    %1 = vector.load %arg2[%c0_1, %c0_2] : memref<32x32xf32, #tpu.memory_space<vmem>>, vector<32x32xf32>
    %cst = arith.constant dense<0.000000e+00> : vector<2x32xf32>
    %2 = tpu.matmul %0, %1, %cst {dimension_numbers = #tpu.dot_dimension_numbers<[1], [0], [0], [1], [0, 0, 1, 1], [], []>} : vector<2x32xf32>, vector<32x32xf32>, vector<2x32xf32> -> vector<2x32xf32>
    %c0_3 = arith.constant 0 : index
    %c0_4 = arith.constant 0 : index
    %3 = vector.load %arg3[%c0_3, %c0_4] : memref<1x32xf32, #tpu.memory_space<vmem>>, vector<1x32xf32>
    %4 = vector.broadcast %3 : vector<1x32xf32> to vector<2x32xf32>
    %5 = arith.addf %2, %4 : vector<2x32xf32>
    %6 = math.tanh %5 : vector<2x32xf32>
    %c0_5 = arith.constant 0 : index
    %c0_6 = arith.constant 0 : index
    %7 = vector.load %arg4[%c0_5, %c0_6] : memref<2x32xf32, #tpu.memory_space<vmem>>, vector<2x32xf32>
    tpu.vector_store %arg4[%c0_5, %c0_6], %6 {strides = array<i32>} : memref<2x32xf32, #tpu.memory_space<vmem>>, vector<2x32xf32>,
    return
  }
  func.func @transform_0(%arg0: i32) -> (i32, i32) {
    %c0_i32 = arith.constant 0 : i32
    %c0_i32_0 = arith.constant 0 : i32
    return %arg0, %c0_i32 : i32, i32
  }
  func.func @transform_1(%arg0: i32) -> (i32, i32) {
    %c0_i32 = arith.constant 0 : i32
    %c0_i32_0 = arith.constant 0 : i32
    %c0_i32_1 = arith.constant 0 : i32
    return %c0_i32, %c0_i32_0 : i32, i32
  }
  func.func @transform_2(%arg0: i32) -> (i32, i32) {
    %c0_i32 = arith.constant 0 : i32
    %c0_i32_0 = arith.constant 0 : i32
    %c0_i32_1 = arith.constant 0 : i32
    return %c0_i32, %c0_i32_0 : i32, i32
  }
  func.func @transform_3(%arg0: i32) -> (i32, i32) {
    %c0_i32 = arith.constant 0 : i32
    %c0_i32_0 = arith.constant 0 : i32
    return %arg0, %c0_i32 : i32, i32
  }
}

module attributes {stable_mosaic.version = 11 : i64} {
  func.func @_pooler_kernel(%arg0: i32, %arg1: memref<2x32xf32, #tpu.memory_space<vmem>>, %arg2: memref<32x32xf32, #tpu.memory_space<vmem>>, %arg3: memref<1x32xf32, #tpu.memory_space<vmem>>, %arg4: memref<2x32xf32, #tpu.memory_space<vmem>>) attributes {dimension_semantics = [#tpu.dimension_semantics<parallel>], iteration_bounds = array<i64: 1>, scalar_prefetch = 0 : i64, scratch_operands = 0 : i64, tpu.core_type = #tpu.core_type<tc>, window_params = [{transform_indices = @transform_0, window_bounds = array<i64: 2, 32>}, {pipeline_mode = #tpu.pipeline_mode<synchronous>, transform_indices = @transform_1, window_bounds = array<i64: 32, 32>}, {pipeline_mode = #tpu.pipeline_mode<synchronous>, transform_indices = @transform_2, window_bounds = array<i64: 1, 32>}, {transform_indices = @transform_3, window_bounds = array<i64: 2, 32>}]} {
    %c0 = arith.constant 0 : index
    %c0_0 = arith.constant 0 : index
    %0 = vector.load %arg1[%c0, %c0_0] : memref<2x32xf32, #tpu.memory_space<vmem>>, vector<2x32xf32>
    %c0_1 = arith.constant 0 : index
    %c0_2 = arith.constant 0 : index
    %1 = vector.load %arg2[%c0_1, %c0_2] : memref<32x32xf32, #tpu.memory_space<vmem>>, vector<32x32xf32>
    %cst = arith.constant dense<0.000000e+00> : vector<2x32xf32>
    %2 = tpu.matmul %0, %1, %cst {dimension_numbers = #tpu.dot_dimension_numbers<[1], [0], [0], [1], [0, 0, 1, 1], [], []>} : vector<2x32xf32>, vector<32x32xf32>, vector<2x32xf32> -> vector<2x32xf32>
    %c0_3 = arith.constant 0 : index
    %c0_4 = arith.constant 0 : index
    %3 = vector.load %arg3[%c0_3, %c0_4] : memref<1x32xf32, #tpu.memory_space<vmem>>, vector<1x32xf32>
    %4 = vector.broadcast %3 : vector<1x32xf32> to vector<2x32xf32>
    %5 = arith.addf %2, %4 : vector<2x32xf32>
    %6 = math.tanh %5 : vector<2x32xf32>
    %c0_5 = arith.constant 0 : index
    %c0_6 = arith.constant 0 : index
    %7 = vector.load %arg4[%c0_5, %c0_6] : memref<2x32xf32, #tpu.memory_space<vmem>>, vector<2x32xf32>
    tpu.vector_store %arg4[%c0_5, %c0_6], %6 {strides = array<i32>} : memref<2x32xf32, #tpu.memory_space<vmem>>, vector<2x32xf32>,
    return
  }
  func.func @transform_0(%arg0: i32) -> (i32, i32) {
    %c0_i32 = arith.constant 0 : i32
    %c0_i32_0 = arith.constant 0 : i32
    return %arg0, %c0_i32 : i32, i32
  }
  func.func @transform_1(%arg0: i32) -> (i32, i32) {
    %c0_i32 = arith.constant 0 : i32
    %c0_i32_0 = arith.constant 0 : i32
    %c0_i32_1 = arith.constant 0 : i32
    return %c0_i32, %c0_i32_0 : i32, i32
  }
  func.func @transform_2(%arg0: i32) -> (i32, i32) {
    %c0_i32 = arith.constant 0 : i32
    %c0_i32_0 = arith.constant 0 : i32
    %c0_i32_1 = arith.constant 0 : i32
    return %c0_i32, %c0_i32_0 : i32, i32
  }
  func.func @transform_3(%arg0: i32) -> (i32, i32) {
    %c0_i32 = arith.constant 0 : i32
    %c0_i32_0 = arith.constant 0 : i32
    return %arg0, %c0_i32 : i32, i32
  }
}

</mosaic_0001>

<llo_original>
// kernel: tpu_custom_call.1
$region0: #{tpu_custom_call.1}
  #allocation0 [shape = 'u32[]', space=smem, size = 0x4, offset = 0x4, fixed_abs, tag = 'smem constant byte address 0x4 - core index']
  #allocation1 [shape = 'u32[144,128]{1,0:T(1,128)}', space=vmem, size = 0x12000, scoped, tag = 'internal scratch']
  %s0 = inlined_call_operand.hbm [shape: f32[2,32], index: 0, kind: input, shape index: {}]
  %s1 = inlined_call_operand.hbm [shape: f32[32,32], index: 1, kind: input, shape index: {}]
  %s2 = inlined_call_operand.vmem [shape: f32[1,32], index: 2, kind: input, shape index: {}]
  %s3 = inlined_call_operand.hbm [shape: f32[2,32], index: 3, kind: output, shape index: {}]
  %s4 = sld [smem:[#allocation0]]
  $region30: #{tpu_custom_call.1} parent=0
    _
  %s6 = ssub.s32 1, %s4
  %s7 = scalar_select 0, %s6, %s4
  $region1: #{tpu_custom_call.1} parent=0
    #allocation2 [shape = 'u8[1024]{0}', space=vmem, size = 0x400, scoped, tag = 'input window, operand 0, single buffered']
    #allocation3 [shape = 's32[1]{0}', space=sflag, size = 0x4, scoped, tag = 'scoped memory for tpu_custom_call.1']
    #allocation4 [shape = 's32[1]{0}', space=sflag, size = 0x4, scoped, tag = 'scoped memory for tpu_custom_call.1']
    #allocation5 [shape = 'u8[16384]{0}', space=vmem, size = 0x4000, scoped, tag = 'input window, operand 1, single buffered']
    #allocation6 [shape = 's32[1]{0}', space=sflag, size = 0x4, scoped, tag = 'scoped memory for tpu_custom_call.1']
    #allocation7 [shape = 'u8[1024]{0}', space=vmem, size = 0x400, scoped, tag = 'output window, operand 0, single buffered']
    %8 = vsyncpa [#allocation3], 0
    %9 = vsyncpa [#allocation6], 0
    %10 = vsyncpa [#allocation4], 0
    // Predicated region
    $region2: #{tpu_custom_call.1} parent=1 // pred_check
      _
    $region3: #{tpu_custom_call.1} parent=1 // pred_check_branch
      %12 = sbr.rel (0) target = $region5
    $region4: #{tpu_custom_call.1} parent=1 // pred_region
      %s14 = ssub.s32 32, 32
      %15 = vsyncadd [#allocation3], %s14
      %s17 = sshll.u32 [#allocation2], 4
      %s18 = int_to_ptr.vmem [resolvable:$true] %s17
      %20 = dma.hbm_to_vmem [thread:$0]  %s0, 32, %s18, [#allocation3]
    $region5: #{tpu_custom_call.1} parent=1 // pred_fallthru
      _
    // Predicated region
    $region6: #{tpu_custom_call.1} parent=1 // pred_check
      _
    $region7: #{tpu_custom_call.1} parent=1 // pred_check_branch
      %22 = sbr.rel (0) target = $region9
    $region8: #{tpu_custom_call.1} parent=1 // pred_region
      %s24 = ssub.s32 512, 512
      %25 = vsyncadd [#allocation6], %s24
      %s26 = sshll.u32 [#allocation5], 4
      %s27 = int_to_ptr.vmem [resolvable:$true] %s26
      %32 = dma.hbm_to_vmem [thread:$0]  %s1, 512, %s27, [#allocation6], 128, 128, 8
    $region9: #{tpu_custom_call.1} parent=1 // pred_fallthru
      _
    // Predicated region
    $region10: #{tpu_custom_call.1} parent=1 // pred_check
      _
    $region11: #{tpu_custom_call.1} parent=1 // pred_check_branch
      %34 = sbr.rel (0) target = $region13
    $region12: #{tpu_custom_call.1} parent=1 // pred_region
      _
    $region13: #{tpu_custom_call.1} parent=1 // pred_fallthru
      _
    // Predicated region
    $region14: #{tpu_custom_call.1} parent=1 // pred_check
      _
    $region15: #{tpu_custom_call.1} parent=1 // pred_check_branch
      %36 = sbr.rel (0) target = $region17
    $region16: #{tpu_custom_call.1} parent=1 // pred_region
      %37 = dma.done [#allocation3], 32
    $region17: #{tpu_custom_call.1} parent=1 // pred_fallthru
      _
    // Predicated region
    $region18: #{tpu_custom_call.1} parent=1 // pred_check
      _
    $region19: #{tpu_custom_call.1} parent=1 // pred_check_branch
      %39 = sbr.rel (0) target = $region21
    $region20: #{tpu_custom_call.1} parent=1 // pred_region
      %40 = dma.done [#allocation6], 512
    $region21: #{tpu_custom_call.1} parent=1 // pred_fallthru
      _
    %v41 = vld [vmem:[#allocation2] sm:$0x3]
    %v42 = vld [vmem:[#allocation5] sm:$0xff]
    %v43 = vld [vmem:[#allocation5 + $0x8] sm:$0xff]
    %v44 = vld [vmem:[#allocation5 + $0x10] sm:$0xff]
    %v45 = vld [vmem:[#allocation5 + $0x18] sm:$0xff]
    %v46 = vld [vmem:[%s2] sm:$0x1]
    %v48 = vlaneseq
    %v49 = vshrl.u32 %v48, 7
    %v50 = vsub.s32 0, %v49
    %v51 = vrot.slane %v46, %v50
    %vm53 = vcmask 261120
    %v55 = vsel %vm53, %v41, 0
    %57 = vmatprep.subr.mxu0 0.0
    %58 = vmatpush1.msra.mxu0 %v42
    %59 = vmatprep.subr.mxu0 0.0
    %60 = vmatpush1.msra.mxu0 %v43
    %61 = vmatprep.subr.mxu0 0.0
    %62 = vmatpush1.msra.mxu0 %v44
    %63 = vmatprep.subr.mxu0 0.0
    %64 = vmatpush1.msra.mxu0 %v45
    %65 = vmatprep.subr.mxu0 0.0
    %66 = vmatpush1.msra.mxu0 0.0
    %67 = vmatprep.subr.mxu0 0.0
    %68 = vmatpush1.msra.mxu0 0.0
    %69 = vmatprep.subr.mxu0 0.0
    %70 = vmatpush1.msra.mxu0 0.0
    %71 = vmatprep.subr.mxu0 0.0
    %72 = vmatpush1.msra.mxu0 0.0
    %73 = vmatprep.subr.mxu0 0.0
    %74 = vmatpush1.msra.mxu0 0.0
    %75 = vmatprep.subr.mxu0 0.0
    %76 = vmatpush1.msra.mxu0 0.0
    %77 = vmatprep.subr.mxu0 0.0
    %78 = vmatpush1.msra.mxu0 0.0
    %79 = vmatprep.subr.mxu0 0.0
    %80 = vmatpush1.msra.mxu0 0.0
    %81 = vmatprep.subr.mxu0 0.0
    %82 = vmatpush1.msra.mxu0 0.0
    %83 = vmatprep.subr.mxu0 0.0
    %84 = vmatpush1.msra.mxu0 0.0
    %85 = vmatprep.subr.mxu0 0.0
    %86 = vmatpush1.msra.mxu0 0.0
    %87 = vmatprep.subr.mxu0 0.0
    %88 = vmatpush1.msra.mxu0 0.0
    %89 = vmatprep.subr.mxu0 0.0
    %90 = vmatpush1.msra.mxu0 0.0
    %91 = vmatprep.subr.mxu0 0.0
    %92 = vmatpush1.msra.mxu0 0.0
    %93 = vmatprep.subr.mxu0 0.0
    %94 = vmatpush1.msra.mxu0 0.0
    %95 = vmatprep.subr.mxu0 0.0
    %96 = vmatpush1.msra.mxu0 0.0
    %97 = vmatprep.subr.mxu0 0.0
    %98 = vmatpush1.msra.mxu0 0.0
    %99 = vmatprep.subr.mxu0 0.0
    %100 = vmatpush1.msra.mxu0 0.0
    %101 = vmatprep.subr.mxu0 0.0
    %102 = vmatpush1.msra.mxu0 0.0
    %103 = vmatprep.subr.mxu0 0.0
    %104 = vmatpush1.msra.mxu0 0.0
    %105 = vmatprep.subr.mxu0 0.0
    %106 = vmatpush1.msra.mxu0 0.0
    %107 = vmatprep.subr.mxu0 0.0
    %108 = vmatpush1.msra.mxu0 0.0
    %109 = vmatprep.subr.mxu0 0.0
    %110 = vmatpush1.msra.mxu0 0.0
    %111 = vmatprep.subr.mxu0 0.0
    %112 = vmatpush1.msra.mxu0 0.0
    %113 = vmatprep.subr.mxu0 0.0
    %114 = vmatpush1.msra.mxu0 0.0
    %115 = vmatprep.subr.mxu0 0.0
    %116 = vmatpush1.msra.mxu0 0.0
    %117 = vmatprep.subr.mxu0 0.0
    %118 = vmatpush1.msra.mxu0 0.0
    %119 = vmatprep.subr.mxu0 0.0
    %120 = vmatpush1.msra.mxu0 0.0
    %121 = vmatprep.mubr.f32.mxu0 0.0
    %122 = vmatmul.mubr.f32.gmra.mrb[0].mxu0 %v55
    %v123 = vpop.f32.mrb[0].mxu0
    %v124 = vadd.f32 %v51, %v123
    %v125 = vpop.f32.mrb[0].mxu0
    %126 = vdwg.mxu0
    %v127 = vtanh.pop %v124
    %vm128 = vcmask 254976
    %129 = vst.msk [vmem:[#allocation7] sm:$0x3] %vm128, %v127
    // Predicated region
    $region22: #{tpu_custom_call.1} parent=1 // pred_check
      _
    $region23: #{tpu_custom_call.1} parent=1 // pred_check_branch
      %131 = sbr.rel (0) target = $region25
    $region24: #{tpu_custom_call.1} parent=1 // pred_region
      %s133 = ssub.s32 32, 32
      %134 = vsyncadd [#allocation4], %s133
      %s136 = sshll.u32 [#allocation7], 4
      %s137 = int_to_ptr.vmem [resolvable:$true] %s136
      %139 = dma.vmem_to_hbm [thread:$0]  %s137, 32, %s3, [#allocation4]
    $region25: #{tpu_custom_call.1} parent=1 // pred_fallthru
      _
    // Predicated region
    $region26: #{tpu_custom_call.1} parent=1 // pred_check
      _
    $region27: #{tpu_custom_call.1} parent=1 // pred_check_branch
      %141 = sbr.rel (0) target = $region29
    $region28: #{tpu_custom_call.1} parent=1 // pred_region
      %142 = dma.done [#allocation4], 32
    $region29: #{tpu_custom_call.1} parent=1 // pred_fallthru
      _
    %143 = vsyncpa [#allocation3], 1
    %144 = vsyncpa [#allocation6], 1
    %145 = vsyncpa [#allocation4], 1

// kernel: tpu_custom_call.1
$region0: #{tpu_custom_call.1}
  #allocation0 [shape = 'u32[]', space=smem, size = 0x4, offset = 0x4, fixed_abs, tag = 'smem constant byte address 0x4 - core index']
  #allocation1 [shape = 'u32[144,128]{1,0:T(1,128)}', space=vmem, size = 0x12000, scoped, tag = 'internal scratch']
  %s0 = inlined_call_operand.hbm [shape: f32[2,32], index: 0, kind: input, shape index: {}]
  %s1 = inlined_call_operand.hbm [shape: f32[32,32], index: 1, kind: input, shape index: {}]
  %s2 = inlined_call_operand.vmem [shape: f32[1,32], index: 2, kind: input, shape index: {}]
  %s3 = inlined_call_operand.hbm [shape: f32[2,32], index: 3, kind: output, shape index: {}]
  %s4 = sld [smem:[#allocation0]]
  $region30: #{tpu_custom_call.1} parent=0
    _
  %s6 = ssub.s32 1, %s4
  %s7 = scalar_select 0, %s6, %s4
  $region1: #{tpu_custom_call.1} parent=0
    #allocation2 [shape = 'u8[1024]{0}', space=vmem, size = 0x400, scoped, tag = 'input window, operand 0, single buffered']
    #allocation3 [shape = 's32[1]{0}', space=sflag, size = 0x4, scoped, tag = 'scoped memory for tpu_custom_call.1']
    #allocation4 [shape = 's32[1]{0}', space=sflag, size = 0x4, scoped, tag = 'scoped memory for tpu_custom_call.1']
    #allocation5 [shape = 'u8[16384]{0}', space=vmem, size = 0x4000, scoped, tag = 'input window, operand 1, single buffered']
    #allocation6 [shape = 's32[1]{0}', space=sflag, size = 0x4, scoped, tag = 'scoped memory for tpu_custom_call.1']
    #allocation7 [shape = 'u8[1024]{0}', space=vmem, size = 0x400, scoped, tag = 'output window, operand 0, single buffered']
    %8 = vsyncpa [#allocation3], 0
    %9 = vsyncpa [#allocation6], 0
    %10 = vsyncpa [#allocation4], 0
    // Predicated region
    $region2: #{tpu_custom_call.1} parent=1 // pred_check
      _
    $region3: #{tpu_custom_call.1} parent=1 // pred_check_branch
      %12 = sbr.rel (0) target = $region5
    $region4: #{tpu_custom_call.1} parent=1 // pred_region
      %s14 = ssub.s32 32, 32
      %15 = vsyncadd [#allocation3], %s14
      %s17 = sshll.u32 [#allocation2], 4
      %s18 = int_to_ptr.vmem [resolvable:$true] %s17
      %20 = dma.hbm_to_vmem [thread:$0]  %s0, 32, %s18, [#allocation3]
    $region5: #{tpu_custom_call.1} parent=1 // pred_fallthru
      _
    // Predicated region
    $region6: #{tpu_custom_call.1} parent=1 // pred_check
      _
    $region7: #{tpu_custom_call.1} parent=1 // pred_check_branch
      %22 = sbr.rel (0) target = $region9
    $region8: #{tpu_custom_call.1} parent=1 // pred_region
      %s24 = ssub.s32 512, 512
      %25 = vsyncadd [#allocation6], %s24
      %s26 = sshll.u32 [#allocation5], 4
      %s27 = int_to_ptr.vmem [resolvable:$true] %s26
      %32 = dma.hbm_to_vmem [thread:$0]  %s1, 512, %s27, [#allocation6], 128, 128, 8
    $region9: #{tpu_custom_call.1} parent=1 // pred_fallthru
      _
    // Predicated region
    $region10: #{tpu_custom_call.1} parent=1 // pred_check
      _
    $region11: #{tpu_custom_call.1} parent=1 // pred_check_branch
      %34 = sbr.rel (0) target = $region13
    $region12: #{tpu_custom_call.1} parent=1 // pred_region
      _
    $region13: #{tpu_custom_call.1} parent=1 // pred_fallthru
      _
    // Predicated region
    $region14: #{tpu_custom_call.1} parent=1 // pred_check
      _
    $region15: #{tpu_custom_call.1} parent=1 // pred_check_branch
      %36 = sbr.rel (0) target = $region17
    $region16: #{tpu_custom_call.1} parent=1 // pred_region
      %37 = dma.done [#allocation3], 32
    $region17: #{tpu_custom_call.1} parent=1 // pred_fallthru
      _
    // Predicated region
    $region18: #{tpu_custom_call.1} parent=1 // pred_check
      _
    $region19: #{tpu_custom_call.1} parent=1 // pred_check_branch
      %39 = sbr.rel (0) target = $region21
    $region20: #{tpu_custom_call.1} parent=1 // pred_region
      %40 = dma.done [#allocation6], 512
    $region21: #{tpu_custom_call.1} parent=1 // pred_fallthru
      _
    %v41 = vld [vmem:[#allocation2] sm:$0x3]
    %v42 = vld [vmem:[#allocation5] sm:$0xff]
    %v43 = vld [vmem:[#allocation5 + $0x8] sm:$0xff]
    %v44 = vld [vmem:[#allocation5 + $0x10] sm:$0xff]
    %v45 = vld [vmem:[#allocation5 + $0x18] sm:$0xff]
    %v46 = vld [vmem:[%s2] sm:$0x1]
    %v48 = vlaneseq
    %v49 = vshrl.u32 %v48, 7
    %v50 = vsub.s32 0, %v49
    %v51 = vrot.slane %v46, %v50
    %vm53 = vcmask 261120
    %v55 = vsel %vm53, %v41, 0
    %57 = vmatprep.subr.mxu0 0.0
    %58 = vmatpush1.msra.mxu0 %v42
    %59 = vmatprep.subr.mxu0 0.0
    %60 = vmatpush1.msra.mxu0 %v43
    %61 = vmatprep.subr.mxu0 0.0
    %62 = vmatpush1.msra.mxu0 %v44
    %63 = vmatprep.subr.mxu0 0.0
    %64 = vmatpush1.msra.mxu0 %v45
    %65 = vmatprep.subr.mxu0 0.0
    %66 = vmatpush1.msra.mxu0 0.0
    %67 = vmatprep.subr.mxu0 0.0
    %68 = vmatpush1.msra.mxu0 0.0
    %69 = vmatprep.subr.mxu0 0.0
    %70 = vmatpush1.msra.mxu0 0.0
    %71 = vmatprep.subr.mxu0 0.0
    %72 = vmatpush1.msra.mxu0 0.0
    %73 = vmatprep.subr.mxu0 0.0
    %74 = vmatpush1.msra.mxu0 0.0
    %75 = vmatprep.subr.mxu0 0.0
    %76 = vmatpush1.msra.mxu0 0.0
    %77 = vmatprep.subr.mxu0 0.0
    %78 = vmatpush1.msra.mxu0 0.0
    %79 = vmatprep.subr.mxu0 0.0
    %80 = vmatpush1.msra.mxu0 0.0
    %81 = vmatprep.subr.mxu0 0.0
    %82 = vmatpush1.msra.mxu0 0.0
    %83 = vmatprep.subr.mxu0 0.0
    %84 = vmatpush1.msra.mxu0 0.0
    %85 = vmatprep.subr.mxu0 0.0
    %86 = vmatpush1.msra.mxu0 0.0
    %87 = vmatprep.subr.mxu0 0.0
    %88 = vmatpush1.msra.mxu0 0.0
    %89 = vmatprep.subr.mxu0 0.0
    %90 = vmatpush1.msra.mxu0 0.0
    %91 = vmatprep.subr.mxu0 0.0
    %92 = vmatpush1.msra.mxu0 0.0
    %93 = vmatprep.subr.mxu0 0.0
    %94 = vmatpush1.msra.mxu0 0.0
    %95 = vmatprep.subr.mxu0 0.0
    %96 = vmatpush1.msra.mxu0 0.0
    %97 = vmatprep.subr.mxu0 0.0
    %98 = vmatpush1.msra.mxu0 0.0
    %99 = vmatprep.subr.mxu0 0.0
    %100 = vmatpush1.msra.mxu0 0.0
    %101 = vmatprep.subr.mxu0 0.0
    %102 = vmatpush1.msra.mxu0 0.0
    %103 = vmatprep.subr.mxu0 0.0
    %104 = vmatpush1.msra.mxu0 0.0
    %105 = vmatprep.subr.mxu0 0.0
    %106 = vmatpush1.msra.mxu0 0.0
    %107 = vmatprep.subr.mxu0 0.0
    %108 = vmatpush1.msra.mxu0 0.0
    %109 = vmatprep.subr.mxu0 0.0
    %110 = vmatpush1.msra.mxu0 0.0
    %111 = vmatprep.subr.mxu0 0.0
    %112 = vmatpush1.msra.mxu0 0.0
    %113 = vmatprep.subr.mxu0 0.0
    %114 = vmatpush1.msra.mxu0 0.0
    %115 = vmatprep.subr.mxu0 0.0
    %116 = vmatpush1.msra.mxu0 0.0
    %117 = vmatprep.subr.mxu0 0.0
    %118 = vmatpush1.msra.mxu0 0.0
    %119 = vmatprep.subr.mxu0 0.0
    %120 = vmatpush1.msra.mxu0 0.0
    %121 = vmatprep.mubr.f32.mxu0 0.0
    %122 = vmatmul.mubr.f32.gmra.mrb[0].mxu0 %v55
    %v123 = vpop.f32.mrb[0].mxu0
    %v124 = vadd.f32 %v51, %v123
    %v125 = vpop.f32.mrb[0].mxu0
    %126 = vdwg.mxu0
    %v127 = vtanh.pop %v124
    %vm128 = vcmask 254976
    %129 = vst.msk [vmem:[#allocation7] sm:$0x3] %vm128, %v127
    // Predicated region
    $region22: #{tpu_custom_call.1} parent=1 // pred_check
      _
    $region23: #{tpu_custom_call.1} parent=1 // pred_check_branch
      %131 = sbr.rel (0) target = $region25
    $region24: #{tpu_custom_call.1} parent=1 // pred_region
      %s133 = ssub.s32 32, 32
      %134 = vsyncadd [#allocation4], %s133
      %s136 = sshll.u32 [#allocation7], 4
      %s137 = int_to_ptr.vmem [resolvable:$true] %s136
      %139 = dma.vmem_to_hbm [thread:$0]  %s137, 32, %s3, [#allocation4]
    $region25: #{tpu_custom_call.1} parent=1 // pred_fallthru
      _
    // Predicated region
    $region26: #{tpu_custom_call.1} parent=1 // pred_check
      _
    $region27: #{tpu_custom_call.1} parent=1 // pred_check_branch
      %141 = sbr.rel (0) target = $region29
    $region28: #{tpu_custom_call.1} parent=1 // pred_region
      %142 = dma.done [#allocation4], 32
    $region29: #{tpu_custom_call.1} parent=1 // pred_fallthru
      _
    %143 = vsyncpa [#allocation3], 1
    %144 = vsyncpa [#allocation6], 1
    %145 = vsyncpa [#allocation4], 1

</llo_original>
